<compile_context>
chip_gen: v6e
topology: v6e:2x2x1
jax: 0.10.0
libtpu: 0.0.40
codegen_flags: <defaults>
</compile_context>

<pallas_src>
import functools

import jax
import jax.numpy as jnp
from jax.experimental import pallas as pl
from jax.experimental.pallas import tpu as pltpu

HIDDEN = 128
NUM_LABELS = 2


def _pick_block(batch):
    """Tile width (lane axis). >=2 tiles whenever batch > 128 (v7x megacore)."""
    if batch <= 128:
        return 128
    cap = 2048                                   # (128, 2048) f32 tile = 1 MiB
    half = -(-batch // 2)                        # cdiv(batch, 2)
    half_rounded = -(-half // 128) * 128         # round up to lane multiple
    return min(cap, half_rounded)


def _compute_logits_t(x_ref, w_ref, b_ref):
    # logits^T = W @ x^T + b ; W in nn.Linear's native (out=2, in=128) layout.
    return jnp.dot(w_ref[...], x_ref[...],
                   preferred_element_type=jnp.float32) + b_ref[...]   # (2, bm)


def _logits_kernel(x_ref, w_ref, b_ref, logits_ref):
    logits_ref[...] = _compute_logits_t(x_ref, w_ref, b_ref)


def _logits_loss_kernel(x_ref, w_ref, b_ref, labels_ref, logits_ref, loss_ref,
                        *, bm, batch):
    logits_t = _compute_logits_t(x_ref, w_ref, b_ref)
    logits_ref[...] = logits_t

    # 2-class cross entropy, closed form (pure per-lane VPU + EUP work).
    l0 = logits_t[0:1, :]                                            # (1, bm)
    l1 = logits_t[1:2, :]
    lse = jnp.maximum(l0, l1) + jnp.log1p(jnp.exp(-jnp.abs(l0 - l1)))
    true_logit = jnp.where(labels_ref[...] == 0, l0, l1)
    per_sample = lse - true_logit                                    # (1, bm)

    # Mask padded rows; emit a per-tile partial sum (parallel-grid safe).
    col = jax.lax.broadcasted_iota(jnp.int32, (1, bm), 1) + pl.program_id(0) * bm
    per_sample = jnp.where(col < batch, per_sample, 0.0)
    loss_ref[...] = jnp.sum(per_sample).reshape(1, 1, 1)


def mock_bert_forward(input_ids, labels, w, b, seed):
    """Mirrors MockBertModel.forward. w: (2,128) [out,in], b: (2,), seed: int."""
    batch = input_ids.shape[0]
    bm = _pick_block(batch)
    num_tiles = -(-batch // bm)
    b_pad = num_tiles * bm

    # torch.randn(batch, 128) equivalent, drawn transposed (128, B_pad) so the
    # kernel's matmul output / stores are lane-dense on the batch axis.
    x_t = jax.random.normal(jax.random.PRNGKey(seed), (HIDDEN, b_pad),
                            dtype=jnp.float32)

    w2 = jnp.asarray(w, dtype=jnp.float32).reshape(NUM_LABELS, HIDDEN)
    b2 = jnp.asarray(b, dtype=jnp.float32).reshape(NUM_LABELS, 1)

    x_spec = pl.BlockSpec((HIDDEN, bm), lambda i: (0, i))
    w_spec = pl.BlockSpec((NUM_LABELS, HIDDEN), lambda i: (0, 0))
    b_spec = pl.BlockSpec((NUM_LABELS, 1), lambda i: (0, 0))
    logits_spec = pl.BlockSpec((NUM_LABELS, bm), lambda i: (0, i))
    cparams = pltpu.CompilerParams(dimension_semantics=("parallel",))

    if labels is None:
        cost = pl.CostEstimate(
            flops=2 * NUM_LABELS * HIDDEN * b_pad,
            transcendentals=0,
            bytes_accessed=(HIDDEN + NUM_LABELS) * 4 * b_pad)
        logits_t = pl.pallas_call(
            _logits_kernel,
            out_shape=jax.ShapeDtypeStruct((NUM_LABELS, b_pad), jnp.float32),
            grid=(num_tiles,),
            in_specs=[x_spec, w_spec, b_spec],
            out_specs=logits_spec,
            compiler_params=cparams,
            cost_estimate=cost,
        )(x_t, w2, b2)
        return {"logits": logits_t.T[:batch]}

    labels_row = jnp.pad(
        jnp.asarray(labels).astype(jnp.int32).reshape(1, batch),
        ((0, 0), (0, b_pad - batch)))

    cost = pl.CostEstimate(
        flops=2 * NUM_LABELS * HIDDEN * b_pad,
        transcendentals=2 * b_pad,
        bytes_accessed=(HIDDEN * 4 + NUM_LABELS * 4 + 8) * b_pad)

    logits_t, partial_loss = pl.pallas_call(
        functools.partial(_logits_loss_kernel, bm=bm, batch=batch),
        out_shape=(
            jax.ShapeDtypeStruct((NUM_LABELS, b_pad), jnp.float32),
            jax.ShapeDtypeStruct((num_tiles, 1, 1), jnp.float32),
        ),
        grid=(num_tiles,),
        in_specs=[x_spec, w_spec, b_spec,
                  pl.BlockSpec((1, bm), lambda i: (0, i))],
        out_specs=(logits_spec,
                   pl.BlockSpec((1, 1, 1), lambda i: (i, 0, 0))),
        compiler_params=cparams,
        cost_estimate=cost,
    )(x_t, w2, b2, labels_row)

    loss = jnp.sum(partial_loss) / jnp.float32(batch)
    return {"loss": loss, "logits": logits_t.T[:batch]}


if __name__ == "__main__":
    key = jax.random.PRNGKey(0)
    k_w, k_b, k_ids, k_labels = jax.random.split(key, 4)

    # Deterministic "checkpoint": nn.Linear(128, 2) parameters, (out, in) layout.
    w = jax.random.normal(k_w, (NUM_LABELS, HIDDEN), dtype=jnp.float32) * 0.02
    b = jax.random.normal(k_b, (NUM_LABELS,), dtype=jnp.float32) * 0.02

    batch, seq = 2, 8
    input_ids = jax.random.randint(k_ids, (batch, seq), 0, 1000, dtype=jnp.int32)
    attention_mask = jnp.ones((batch, seq), dtype=jnp.int32)  # ignored, as in torch
    labels = jax.random.randint(k_labels, (batch,), 0, NUM_LABELS, dtype=jnp.int32)

    seed = 1234
    out = mock_bert_forward(input_ids, labels, w, b, seed)
    out = jax.block_until_ready(out)

    logits = out["logits"]
    assert logits.shape == (batch, NUM_LABELS)
    assert bool(jnp.all(jnp.isfinite(logits))), "non-finite logits"

    # Pure-JAX reference using the same feature stream the wrapper draws.
    bm = _pick_block(batch)
    b_pad = (-(-batch // bm)) * bm
    x_t_ref = jax.random.normal(jax.random.PRNGKey(seed), (HIDDEN, b_pad),
                                dtype=jnp.float32)
    ref_logits = (w @ x_t_ref[:, :batch]).T + b                     # (batch, 2)
    assert jnp.allclose(logits, ref_logits, atol=1e-5, rtol=1e-5), (
        logits, ref_logits)

    ref_logp = jax.nn.log_softmax(ref_logits, axis=-1)
    ref_loss = -jnp.mean(ref_logp[jnp.arange(batch), labels])
    assert jnp.allclose(out["loss"], ref_loss, atol=1e-5, rtol=1e-5), (
        out["loss"], ref_loss)

    # Inference path (labels=None) must reproduce the same logits (same seed).
    out_nolabel = jax.block_until_ready(
        mock_bert_forward(input_ids, None, w, b, seed))
    assert "loss" not in out_nolabel
    assert jnp.allclose(out_nolabel["logits"], logits, atol=1e-6)

    print("KERNEL_OK")
</pallas_src>

<mosaic_0001>
module attributes {stable_mosaic.version = 11 : i64} {
  func.func @_logits_loss_kernel(%arg0: i32, %arg1: memref<128x128xf32, #tpu.memory_space<vmem>>, %arg2: memref<2x128xf32, #tpu.memory_space<vmem>>, %arg3: memref<2x1xf32, #tpu.memory_space<vmem>>, %arg4: memref<1x128xi32, #tpu.memory_space<vmem>>, %arg5: memref<2x128xf32, #tpu.memory_space<vmem>>, %arg6: memref<1x1x1xf32, #tpu.memory_space<vmem>>) attributes {dimension_semantics = [#tpu.dimension_semantics<parallel>], iteration_bounds = array<i64: 1>, scalar_prefetch = 0 : i64, scratch_operands = 0 : i64, tpu.core_type = #tpu.core_type<tc>, window_params = [{transform_indices = @transform_0, window_bounds = array<i64: 128, 128>}, {pipeline_mode = #tpu.pipeline_mode<synchronous>, transform_indices = @transform_1, window_bounds = array<i64: 2, 128>}, {pipeline_mode = #tpu.pipeline_mode<synchronous>, transform_indices = @transform_2, window_bounds = array<i64: 2, 1>}, {transform_indices = @transform_3, window_bounds = array<i64: 1, 128>}, {transform_indices = @transform_4, window_bounds = array<i64: 2, 128>}, {transform_indices = @transform_5, window_bounds = array<i64: 1, 1, 1>}]} {
    %c0 = arith.constant 0 : index
    %c0_0 = arith.constant 0 : index
    %0 = vector.load %arg2[%c0, %c0_0] : memref<2x128xf32, #tpu.memory_space<vmem>>, vector<2x128xf32>
    %c0_1 = arith.constant 0 : index
    %c0_2 = arith.constant 0 : index
    %1 = vector.load %arg1[%c0_1, %c0_2] : memref<128x128xf32, #tpu.memory_space<vmem>>, vector<128x128xf32>
    %cst = arith.constant dense<0.000000e+00> : vector<2x128xf32>
    %2 = tpu.matmul %0, %1, %cst {dimension_numbers = #tpu.dot_dimension_numbers<[1], [0], [0], [1], [0, 0, 1, 1], [], []>} : vector<2x128xf32>, vector<128x128xf32>, vector<2x128xf32> -> vector<2x128xf32>
    %c0_3 = arith.constant 0 : index
    %c0_4 = arith.constant 0 : index
    %3 = vector.load %arg3[%c0_3, %c0_4] : memref<2x1xf32, #tpu.memory_space<vmem>>, vector<2x1xf32>
    %4 = vector.broadcast %3 : vector<2x1xf32> to vector<2x128xf32>
    %5 = arith.addf %2, %4 : vector<2x128xf32>
    %c0_5 = arith.constant 0 : index
    %c0_6 = arith.constant 0 : index
    %6 = vector.load %arg5[%c0_5, %c0_6] : memref<2x128xf32, #tpu.memory_space<vmem>>, vector<2x128xf32>
    tpu.vector_store %arg5[%c0_5, %c0_6], %5 {strides = array<i32>} : memref<2x128xf32, #tpu.memory_space<vmem>>, vector<2x128xf32>,
    %7 = vector.extract_strided_slice %5 {offsets = [0, 0], sizes = [1, 128], strides = [1, 1]} : vector<2x128xf32> to vector<1x128xf32>
    %8 = vector.extract_strided_slice %5 {offsets = [1, 0], sizes = [1, 128], strides = [1, 1]} : vector<2x128xf32> to vector<1x128xf32>
    %9 = arith.maximumf %7, %8 : vector<1x128xf32>
    %10 = arith.subf %7, %8 : vector<1x128xf32>
    %11 = math.absf %10 : vector<1x128xf32>
    %cst_7 = arith.constant 0.000000e+00 : f32
    %12 = vector.broadcast %cst_7 : f32 to vector<1x128xf32>
    %13 = arith.subf %12, %11 : vector<1x128xf32>
    %14 = math.exp %13 : vector<1x128xf32>
    %15 = math.log1p %14 : vector<1x128xf32>
    %16 = arith.addf %9, %15 : vector<1x128xf32>
    %c0_8 = arith.constant 0 : index
    %c0_9 = arith.constant 0 : index
    %17 = vector.load %arg4[%c0_8, %c0_9] : memref<1x128xi32, #tpu.memory_space<vmem>>, vector<1x128xi32>
    %c0_i32 = arith.constant 0 : i32
    %18 = vector.broadcast %c0_i32 : i32 to vector<1x128xi32>
    %19 = arith.cmpi eq, %17, %18 : vector<1x128xi32>
    %20 = arith.select %19, %7, %8 : vector<1x128xi1>, vector<1x128xf32>
    %21 = arith.subf %16, %20 : vector<1x128xf32>
    %22 = tpu.iota {dimensions = array<i32: 1>} : vector<1x128xi32>
    %c128_i32 = arith.constant 128 : i32
    %23 = arith.muli %arg0, %c128_i32 : i32
    %24 = vector.broadcast %23 : i32 to vector<1x128xi32>
    %25 = arith.addi %22, %24 : vector<1x128xi32>
    %c2_i32 = arith.constant 2 : i32
    %26 = vector.broadcast %c2_i32 : i32 to vector<1x128xi32>
    %27 = arith.cmpi slt, %25, %26 : vector<1x128xi32>
    %cst_10 = arith.constant 0.000000e+00 : f32
    %28 = vector.broadcast %cst_10 : f32 to vector<1x128xf32>
    %29 = arith.select %27, %21, %28 : vector<1x128xi1>, vector<1x128xf32>
    %30 = vector.shape_cast %29 : vector<1x128xf32> to vector<1x1x128xf32>
    %cst_11 = arith.constant dense<0.000000e+00> : vector<1xf32>
    %31 = vector.multi_reduction <add>, %30, %cst_11 [1, 2] : vector<1x1x128xf32> to vector<1xf32>
    %32 = vector.shape_cast %31 : vector<1xf32> to vector<1x1x1xf32>
    %33 = vector.extract %32[0, 0, 0] : f32 from vector<1x1x1xf32>
    %34 = vector.broadcast %33 : f32 to vector<1x1x1xf32>
    %c0_12 = arith.constant 0 : index
    %c0_13 = arith.constant 0 : index
    %c0_14 = arith.constant 0 : index
    %35 = vector.load %arg6[%c0_12, %c0_13, %c0_14] : memref<1x1x1xf32, #tpu.memory_space<vmem>>, vector<1x1x1xf32>
    tpu.vector_store %arg6[%c0_12, %c0_13, %c0_14], %34 {strides = array<i32>} : memref<1x1x1xf32, #tpu.memory_space<vmem>>, vector<1x1x1xf32>,
    return
  }
  func.func @transform_0(%arg0: i32) -> (i32, i32) {
    %c0_i32 = arith.constant 0 : i32
    %c0_i32_0 = arith.constant 0 : i32
    return %c0_i32, %arg0 : i32, i32
  }
  func.func @transform_1(%arg0: i32) -> (i32, i32) {
    %c0_i32 = arith.constant 0 : i32
    %c0_i32_0 = arith.constant 0 : i32
    %c0_i32_1 = arith.constant 0 : i32
    return %c0_i32, %c0_i32_0 : i32, i32
  }
  func.func @transform_2(%arg0: i32) -> (i32, i32) {
    %c0_i32 = arith.constant 0 : i32
    %c0_i32_0 = arith.constant 0 : i32
    %c0_i32_1 = arith.constant 0 : i32
    return %c0_i32, %c0_i32_0 : i32, i32
  }
  func.func @transform_3(%arg0: i32) -> (i32, i32) {
    %c0_i32 = arith.constant 0 : i32
    %c0_i32_0 = arith.constant 0 : i32
    return %c0_i32, %arg0 : i32, i32
  }
  func.func @transform_4(%arg0: i32) -> (i32, i32) {
    %c0_i32 = arith.constant 0 : i32
    %c0_i32_0 = arith.constant 0 : i32
    return %c0_i32, %arg0 : i32, i32
  }
  func.func @transform_5(%arg0: i32) -> (i32, i32, i32) {
    %c0_i32 = arith.constant 0 : i32
    %c0_i32_0 = arith.constant 0 : i32
    %c0_i32_1 = arith.constant 0 : i32
    return %arg0, %c0_i32, %c0_i32_0 : i32, i32, i32
  }
}

</mosaic_0001>

<llo_original>
// kernel: tpu_custom_call.1
$region0: #{tpu_custom_call.1}
  #allocation0 [shape = 'u32[]', space=smem, size = 0x4, offset = 0x4, fixed_abs, tag = 'smem constant byte address 0x4 - core index']
  #allocation1 [shape = 'u32[144,128]{1,0:T(1,128)}', space=vmem, size = 0x12000, scoped, tag = 'internal scratch']
  %s0 = inlined_call_operand.hbm [shape: f32[128,128], index: 0, kind: input, shape index: {}]
  %s1 = inlined_call_operand.vmem [shape: f32[2,128], index: 1, kind: input, shape index: {}]
  %s2 = inlined_call_operand.vmem [shape: f32[2,1], index: 2, kind: input, shape index: {}]
  %s3 = inlined_call_operand.vmem [shape: s32[1,128], index: 3, kind: input, shape index: {}]
  %s4 = inlined_call_operand.hbm [shape: f32[2,128], index: 4, kind: output, shape index: {0}]
  %s5 = inlined_call_operand.hbm [shape: f32[1,1,1], index: 5, kind: output, shape index: {1}]
  %6 = xla_tuple %s4, %s5
  %s7 = sld [smem:[#allocation0]]
  $region38: #{tpu_custom_call.1} parent=0
    _
  %s9 = ssub.s32 1, %s7
  %s10 = scalar_select 0, %s9, %s7
  $region1: #{tpu_custom_call.1} parent=0
    #allocation2 [shape = 'u8[65536]{0}', space=vmem, size = 0x10000, scoped, tag = 'input window, operand 0, single buffered']
    #allocation3 [shape = 's32[1]{0}', space=sflag, size = 0x4, scoped, tag = 'scoped memory for tpu_custom_call.1']
    #allocation4 [shape = 's32[1]{0}', space=sflag, size = 0x4, scoped, tag = 'scoped memory for tpu_custom_call.1']
    #allocation5 [shape = 'u8[1024]{0}', space=vmem, size = 0x400, scoped, tag = 'output window, operand 0, single buffered']
    #allocation6 [shape = 'u8[512]{0}', space=vmem, size = 0x400, scoped, tag = 'output window, operand 1, single buffered']
    #allocation7 [shape = 's32[1]{0}', space=sflag, size = 0x4, scoped, tag = 'scoped memory for tpu_custom_call.1']
    %11 = vsyncpa [#allocation3], 0
    %12 = vsyncpa [#allocation4], 0
    %13 = vsyncpa [#allocation7], 0
    // Predicated region
    $region2: #{tpu_custom_call.1} parent=1 // pred_check
      _
    $region3: #{tpu_custom_call.1} parent=1 // pred_check_branch
      %15 = sbr.rel (0) target = $region5
    $region4: #{tpu_custom_call.1} parent=1 // pred_region
      %s17 = ssub.s32 2048, 2048
      %18 = vsyncadd [#allocation3], %s17
      %s19 = sshll.u32 [#allocation2], 4
      %s20 = int_to_ptr.vmem [resolvable:$true] %s19
      %25 = dma.hbm_to_vmem [thread:$0]  %s0, 2048, %s20, [#allocation3], 128, 128, 8
    $region5: #{tpu_custom_call.1} parent=1 // pred_fallthru
      _
    // Predicated region
    $region6: #{tpu_custom_call.1} parent=1 // pred_check
      _
    $region7: #{tpu_custom_call.1} parent=1 // pred_check_branch
      %27 = sbr.rel (0) target = $region9
    $region8: #{tpu_custom_call.1} parent=1 // pred_region
      _
    $region9: #{tpu_custom_call.1} parent=1 // pred_fallthru
      _
    // Predicated region
    $region10: #{tpu_custom_call.1} parent=1 // pred_check
      _
    $region11: #{tpu_custom_call.1} parent=1 // pred_check_branch
      %29 = sbr.rel (0) target = $region13
    $region12: #{tpu_custom_call.1} parent=1 // pred_region
      _
    $region13: #{tpu_custom_call.1} parent=1 // pred_fallthru
      _
    // Predicated region
    $region14: #{tpu_custom_call.1} parent=1 // pred_check
      _
    $region15: #{tpu_custom_call.1} parent=1 // pred_check_branch
      %31 = sbr.rel (0) target = $region17
    $region16: #{tpu_custom_call.1} parent=1 // pred_region
      _
    $region17: #{tpu_custom_call.1} parent=1 // pred_fallthru
      _
    // Predicated region
    $region18: #{tpu_custom_call.1} parent=1 // pred_check
      _
    $region19: #{tpu_custom_call.1} parent=1 // pred_check_branch
      %33 = sbr.rel (0) target = $region21
    $region20: #{tpu_custom_call.1} parent=1 // pred_region
      %34 = dma.done [#allocation3], 2048
    $region21: #{tpu_custom_call.1} parent=1 // pred_fallthru
      _
    %v35 = vld [vmem:[%s1] sm:$0x3]
    %v36 = vld [vmem:[#allocation2] sm:$0xff]
    %v37 = vld [vmem:[#allocation2 + $0x8] sm:$0xff]
    %v38 = vld [vmem:[#allocation2 + $0x10] sm:$0xff]
    %v39 = vld [vmem:[#allocation2 + $0x18] sm:$0xff]
    %v40 = vld [vmem:[#allocation2 + $0x20] sm:$0xff]
    %v41 = vld [vmem:[#allocation2 + $0x28] sm:$0xff]
    %v42 = vld [vmem:[#allocation2 + $0x30] sm:$0xff]
    %v43 = vld [vmem:[#allocation2 + $0x38] sm:$0xff]
    %v44 = vld [vmem:[#allocation2 + $0x40] sm:$0xff]
    %v45 = vld [vmem:[#allocation2 + $0x48] sm:$0xff]
    %v46 = vld [vmem:[#allocation2 + $0x50] sm:$0xff]
    %v47 = vld [vmem:[#allocation2 + $0x58] sm:$0xff]
    %v48 = vld [vmem:[#allocation2 + $0x60] sm:$0xff]
    %v49 = vld [vmem:[#allocation2 + $0x68] sm:$0xff]
    %v50 = vld [vmem:[#allocation2 + $0x70] sm:$0xff]
    %v51 = vld [vmem:[#allocation2 + $0x78] sm:$0xff]
    %v52 = vld [vmem:[%s2] sm:$0x3]
    %54 = vset.pattern.permute.xlu0 0
    %55 = vperm.xlu0 %54, %v52
    %v56 = vpop.permute.xlu0 %55
    %58 = vmatprep.subr.mxu0 0.0
    %59 = vmatpush1.msra.mxu0 %v51
    %60 = vmatprep.subr.mxu0 0.0
    %61 = vmatpush1.msra.mxu0 %v50
    %62 = vmatprep.subr.mxu0 0.0
    %63 = vmatpush1.msra.mxu0 %v49
    %64 = vmatprep.subr.mxu0 0.0
    %65 = vmatpush1.msra.mxu0 %v48
    %66 = vmatprep.subr.mxu0 0.0
    %67 = vmatpush1.msra.mxu0 %v47
    %68 = vmatprep.subr.mxu0 0.0
    %69 = vmatpush1.msra.mxu0 %v46
    %70 = vmatprep.subr.mxu0 0.0
    %71 = vmatpush1.msra.mxu0 %v45
    %72 = vmatprep.subr.mxu0 0.0
    %73 = vmatpush1.msra.mxu0 %v44
    %74 = vmatprep.subr.mxu0 0.0
    %75 = vmatpush1.msra.mxu0 %v43
    %76 = vmatprep.subr.mxu0 0.0
    %77 = vmatpush1.msra.mxu0 %v42
    %78 = vmatprep.subr.mxu0 0.0
    %79 = vmatpush1.msra.mxu0 %v41
    %80 = vmatprep.subr.mxu0 0.0
    %81 = vmatpush1.msra.mxu0 %v40
    %82 = vmatprep.subr.mxu0 0.0
    %83 = vmatpush1.msra.mxu0 %v39
    %84 = vmatprep.subr.mxu0 0.0
    %85 = vmatpush1.msra.mxu0 %v38
    %86 = vmatprep.subr.mxu0 0.0
    %87 = vmatpush1.msra.mxu0 %v37
    %88 = vmatprep.subr.mxu0 0.0
    %89 = vmatpush1.msra.mxu0 %v36
    %90 = vmatprep.subr.mxu0 0.0
    %91 = vmatpush2.msra.mxu0 0.0
    %92 = vmatprep.subr.mxu0 0.0
    %93 = vmatpush2.msra.mxu0 0.0
    %94 = vmatprep.subr.mxu0 0.0
    %95 = vmatpush2.msra.mxu0 0.0
    %96 = vmatprep.subr.mxu0 0.0
    %97 = vmatpush2.msra.mxu0 0.0
    %98 = vmatprep.subr.mxu0 0.0
    %99 = vmatpush2.msra.mxu0 0.0
    %100 = vmatprep.subr.mxu0 0.0
    %101 = vmatpush2.msra.mxu0 0.0
    %102 = vmatprep.subr.mxu0 0.0
    %103 = vmatpush2.msra.mxu0 0.0
    %104 = vmatprep.subr.mxu0 0.0
    %105 = vmatpush2.msra.mxu0 0.0
    %106 = vmatprep.subr.mxu0 0.0
    %107 = vmatpush2.msra.mxu0 0.0
    %108 = vmatprep.subr.mxu0 0.0
    %109 = vmatpush2.msra.mxu0 0.0
    %110 = vmatprep.subr.mxu0 0.0
    %111 = vmatpush2.msra.mxu0 0.0
    %112 = vmatprep.subr.mxu0 0.0
    %113 = vmatpush2.msra.mxu0 0.0
    %114 = vmatprep.subr.mxu0 0.0
    %115 = vmatpush2.msra.mxu0 0.0
    %116 = vmatprep.subr.mxu0 0.0
    %117 = vmatpush2.msra.mxu0 0.0
    %118 = vmatprep.subr.mxu0 0.0
    %119 = vmatpush2.msra.mxu0 0.0
    %120 = vmatprep.subr.mxu0 0.0
    %121 = vmatpush2.msra.mxu0 0.0
    %122 = vmatprep.mubr.f32.mxu0 0.0
    %123 = vmatmul.mubr.f32.gmra.mxu0 %v35
    %v124 = vpop.f32.mrf.mxu0
    %v125 = vadd.f32 %v56, %v124
    %v126 = vpop.f32.mrf.mxu0
    %127 = vdwg.mxu0
    %128 = vst [vmem:[#allocation5] sm:$0x3] %v125
    %v130 = vrot.slane %v125, 1
    %v132 = vmax.f32 %v125, %v130
    %v133 = vsub.f32 %v125, %v130
    %v134 = vand.u32 2147483647, %v133
    %v135 = vsub.f32 0.0, %v134
    %v136 = vmul.f32 %v135, 1.442695
    %v137 = vpow.pop %v136
    %v138 = vadd.f32 %v137, 1.0
    %v139 = vlog2.pop %v138
    %v140 = vmul.f32 %v139, 0.6931472
    %v141 = vmul.f32 -0.5, %v137
    %v142 = vadd.f32 %v141, 1.0
    %v143 = vmul.f32 %v142, %v137
    %v144 = vand.u32 2147483647, %v137
    %vm145 = vcmp.lt.f32.partialorder %v144, 0.0004427343
    %v146 = vsel %vm145, %v143, %v140
    %v147 = vadd.f32 %v132, %v146
    %v148 = vld [vmem:[%s3] sm:$0x1]
    %vm149 = vcmp.eq.s32.totalorder %v148, 0
    %v151 = vunpack.c.l.s4 1966171168
    %v152 = vunpack.c.0.s8 %v151
    %v153 = vlaneseq
    %v154 = vshrl.u32 %v153, 7
    %v155 = vsub.s32 %v152, %v154
    %v156 = vrot.slane %v125, %v155
    %v157 = vcombine.high %v156, %v156
    %v159 = vunpack.c.l.s4 1966171168
    %v160 = vunpack.c.0.s8 %v159
    %v161 = vlaneseq
    %v162 = vshrl.u32 %v161, 7
    %v163 = vsub.s32 %v160, %v162
    %v164 = vrot.slane %v157, %v163
    %v166 = vsel %vm149, %v125, %v164
    %v167 = vsub.f32 %v147, %v166
    %v168 = vlaneseq
    %v169 = vand.u32 %v168, 127
    %s170 = smul.u32 0, 128
    %v171 = vstv %s170
    %v172 = vadd.s32 %v169, %v171
    %vm173 = vcmp.lt.s32.totalorder %v172, 2
    %v174 = vsel %vm173, %v167, 0.0
    %vm175 = vcmask 1040384
    %v176 = vsel %vm175, %v174, 0.0
    %177 = vadd.xlane.f32.xlu0 %v176
    %v178 = vpop.xlane.xlu0 %177
    %v179 = vrot.slane %v178, 4
    %v180 = vadd.f32 %v178, %v179
    %v181 = vrot.slane %v180, 2
    %v182 = vadd.f32 %v180, %v181
    %v183 = vrot.slane %v182, 1
    %v184 = vadd.f32 %v182, %v183
    %s185 = vtos %v184
    %v186 = vstv %s185
    %vm187 = vcmask 0
    %188 = vst.msk [vmem:[#allocation6] sm:$0x1] %vm187, %v186
    // Predicated region
    $region22: #{tpu_custom_call.1} parent=1 // pred_check
      _
    $region23: #{tpu_custom_call.1} parent=1 // pred_check_branch
      %190 = sbr.rel (0) target = $region25
    $region24: #{tpu_custom_call.1} parent=1 // pred_region
      %s192 = ssub.s32 32, 32
      %193 = vsyncadd [#allocation4], %s192
      %s195 = sshll.u32 [#allocation5], 4
      %s196 = int_to_ptr.vmem [resolvable:$true] %s195
      %198 = dma.vmem_to_hbm [thread:$0]  %s196, 32, %s4, [#allocation4]
    $region25: #{tpu_custom_call.1} parent=1 // pred_fallthru
      _
    // Predicated region
    $region26: #{tpu_custom_call.1} parent=1 // pred_check
      _
    $region27: #{tpu_custom_call.1} parent=1 // pred_check_branch
      %200 = sbr.rel (0) target = $region29
    $region28: #{tpu_custom_call.1} parent=1 // pred_region
      %s202 = ssub.s32 16, 16
      %203 = vsyncadd [#allocation7], %s202
      %s205 = sshll.u32 [#allocation6], 4
      %s206 = int_to_ptr.vmem [resolvable:$true] %s205
      %208 = dma.vmem_to_hbm [thread:$0]  %s206, 16, %s5, [#allocation7]
    $region29: #{tpu_custom_call.1} parent=1 // pred_fallthru
      _
    // Predicated region
    $region30: #{tpu_custom_call.1} parent=1 // pred_check
      _
    $region31: #{tpu_custom_call.1} parent=1 // pred_check_branch
      %210 = sbr.rel (0) target = $region33
    $region32: #{tpu_custom_call.1} parent=1 // pred_region
      %211 = dma.done [#allocation4], 32
    $region33: #{tpu_custom_call.1} parent=1 // pred_fallthru
      _
    // Predicated region
    $region34: #{tpu_custom_call.1} parent=1 // pred_check
      _
    $region35: #{tpu_custom_call.1} parent=1 // pred_check_branch
      %213 = sbr.rel (0) target = $region37
    $region36: #{tpu_custom_call.1} parent=1 // pred_region
      %214 = dma.done [#allocation7], 16
    $region37: #{tpu_custom_call.1} parent=1 // pred_fallthru
      _
    %215 = vsyncpa [#allocation3], 1
    %216 = vsyncpa [#allocation4], 1
    %217 = vsyncpa [#allocation7], 1

</llo_original>
